<compile_context>
chip_gen: v7x
topology: tpu7x:2x2x1
jax: 0.10.0
libtpu: 0.0.40
codegen_flags: <defaults>
</compile_context>

<pallas_src>
import math

import numpy as np
import jax
import jax.numpy as jnp
from jax.experimental import pallas as pl
from jax.experimental.pallas import tpu as pltpu


def _silu_conv1x1_kernel(x_ref, w_ref, b_ref, o_ref):
    # x_ref: (C, TL)  activations, channels on sublanes, (t*h*w) tile on lanes
    # w_ref: (O2, C)  VMEM-resident 1x1-conv weight
    # b_ref: (O2, 1)  bias column
    # o_ref: (O2, TL) lane-dense output tile
    x = x_ref[...].astype(jnp.float32)
    s = x * jax.nn.sigmoid(x)                                  # SiLU (VPU + EUP)
    y = jnp.dot(w_ref[...].astype(jnp.float32), s,
                preferred_element_type=jnp.float32)            # (O2, TL) on MXU
    o_ref[...] = (y + b_ref[...]).astype(o_ref.dtype)


def _pick_lane_tile(L, target):
    """Lane tile: full extent if small, else a multiple of 128 (prefer a divisor)."""
    if L <= target:
        return L
    cap = (target // 128) * 128
    for cand in range(cap, 0, -128):
        if L % cand == 0:
            return cand
    return cap  # ragged last tile: Pallas masks the out-of-bounds lanes


def _silu_pointwise_conv(x3, w_mat, bias, *, lane_tile=8192):
    """x3: (B, C, L); w_mat: (O2, C); bias: (O2,) -> (B, O2, L)."""
    B, C, L = x3.shape
    O2 = w_mat.shape[0]
    tl = _pick_lane_tile(L, lane_tile)
    grid = (B, pl.cdiv(L, tl))
    bias2d = bias.reshape(O2, 1)

    return pl.pallas_call(
        _silu_conv1x1_kernel,
        out_shape=jax.ShapeDtypeStruct((B, O2, L), x3.dtype),
        grid_spec=pltpu.PrefetchScalarGridSpec(
            num_scalar_prefetch=0,
            grid=grid,
            in_specs=[
                pl.BlockSpec((None, C, tl), lambda bi, li: (bi, 0, li)),
                pl.BlockSpec((O2, C), lambda bi, li: (0, 0)),   # weight: resident
                pl.BlockSpec((O2, 1), lambda bi, li: (0, 0)),   # bias: resident
            ],
            out_specs=pl.BlockSpec((None, O2, tl), lambda bi, li: (bi, 0, li)),
        ),
        compiler_params=pltpu.CompilerParams(
            dimension_semantics=("parallel", "parallel")),
    )(x3, w_mat, bias2d)


def time_upsample2x(x, conv_weight, conv_bias, dim_out, *, lane_tile=8192):
    """Exact reproduction of TimeUpsample2x.forward.

    x:           (b, c, t, h, w)
    conv_weight: (2*dim_out, c)   (Conv1d kernel-size-1 weight, squeezed)
    conv_bias:   (2*dim_out,)
    """
    b, c, t, h, w = x.shape
    o2 = conv_weight.shape[0]
    assert o2 == 2 * dim_out
    # Structural constraint inherited from the torch module's final reshape.
    assert dim_out * (2 * t - 1) == c * t, (
        "TimeUpsample2x requires dim_out * (2*t - 1) == dim * t")

    L = t * h * w
    x3 = x.reshape(b, c, L)                                    # bitcast view
    y = _silu_pointwise_conv(x3, conv_weight, conv_bias,
                             lane_tile=lane_tile)              # (b, 2*dim_out, L)

    # Fold the p=2 interleave, the out[:, :, 1:] slice, and the final flat
    # (dim_out*(2t-1)) -> (c, t) reinterpretation into one static row gather
    # over the fused (2*dim_out * t) axis.  The (h, w) lanes stay dense.
    # TODO(synk): this gather is a non-rectangular (channel, time) permutation,
    # not expressible as a BlockSpec index_map, so it stays as one XLA pass.
    f = np.arange(c * t)
    co = f // (2 * t - 1)
    j = f % (2 * t - 1) + 1                                    # skip dropped step 0
    idx = jnp.asarray((2 * co + (j % 2)) * t + (j // 2), dtype=jnp.int32)

    y = y.reshape(b, o2 * t, h * w)                            # bitcast view
    out = jnp.take(y, idx, axis=1)                             # (b, c*t, h*w)
    return out.reshape(b, c, t, h, w)


def _reference_forward(x, conv_weight, conv_bias, dim_out):
    """Pure-JAX reference matching the PyTorch forward, for verification."""
    b, c, t, h, w = x.shape
    xr = jnp.transpose(x, (0, 3, 4, 1, 2)).reshape(-1, c, t)
    s = xr * jax.nn.sigmoid(xr)
    y = jnp.einsum("oc,nct->not", conv_weight, s) + conv_bias[None, :, None]
    n = y.shape[0]
    y = y.reshape(n, dim_out, 2, t)
    y = jnp.transpose(y, (0, 1, 3, 2)).reshape(n, dim_out, 2 * t)
    y = y[:, :, 1:]
    y = y.reshape(b, h, w, c, t)
    return jnp.transpose(y, (0, 3, 4, 1, 2))


if __name__ == "__main__":
    # The module's final torch.reshape([b, h, w, c, t]) requires
    # dim_out * (2*t - 1) == dim * t.  Pick dim = 2*t - 1, dim_out = t.
    b, dim, t, h, w = 2, 15, 8, 8, 8
    dim_out = 8

    key = jax.random.PRNGKey(0)
    kx, kw = jax.random.split(key)

    x = jax.random.normal(kx, (b, dim, t, h, w), dtype=jnp.float32)

    # Deterministic parameter init mirroring init_conv_:
    # kaiming_uniform_ on (dim_out, dim, 1) -> U(-sqrt(6/fan_in), sqrt(6/fan_in)),
    # fan_in = dim; then repeat 'o ... -> (o 2) ...'; bias = 0.
    bound = math.sqrt(6.0 / dim)
    w_half = jax.random.uniform(kw, (dim_out, dim), jnp.float32, -bound, bound)
    conv_weight = jnp.repeat(w_half, 2, axis=0)        # (2*dim_out, dim)
    conv_bias = jnp.zeros((2 * dim_out,), jnp.float32)

    fwd = jax.jit(time_upsample2x, static_argnums=(3,))
    out = jax.block_until_ready(fwd(x, conv_weight, conv_bias, dim_out))

    ref = _reference_forward(x, conv_weight, conv_bias, dim_out)
    assert out.shape == (b, dim, t, h, w)
    assert jnp.allclose(out, ref, atol=1e-5, rtol=1e-5), "mismatch vs reference"

    print("KERNEL_OK")
</pallas_src>

<mosaic_0001>
module attributes {stable_mosaic.version = 11 : i64} {
  func.func @_silu_conv1x1_kernel(%arg0: i32, %arg1: i32, %arg2: memref<1x15x512xf32, #tpu.memory_space<vmem>>, %arg3: memref<16x15xf32, #tpu.memory_space<vmem>>, %arg4: memref<16x1xf32, #tpu.memory_space<vmem>>, %arg5: memref<1x16x512xf32, #tpu.memory_space<vmem>>) attributes {dimension_semantics = [#tpu.dimension_semantics<parallel>, #tpu.dimension_semantics<parallel>], iteration_bounds = array<i64: 2, 1>, scalar_prefetch = 0 : i64, scratch_operands = 0 : i64, tpu.core_type = #tpu.core_type<tc>, window_params = [{transform_indices = @transform_0, window_bounds = array<i64: 1, 15, 512>}, {pipeline_mode = #tpu.pipeline_mode<synchronous>, transform_indices = @transform_1, window_bounds = array<i64: 16, 15>}, {pipeline_mode = #tpu.pipeline_mode<synchronous>, transform_indices = @transform_2, window_bounds = array<i64: 16, 1>}, {transform_indices = @transform_3, window_bounds = array<i64: 1, 16, 512>}]} {
    %c0 = arith.constant 0 : index
    %c0_0 = arith.constant 0 : index
    %c0_1 = arith.constant 0 : index
    %0 = vector.load %arg2[%c0, %c0_0, %c0_1] : memref<1x15x512xf32, #tpu.memory_space<vmem>>, vector<1x15x512xf32>
    %1 = vector.shape_cast %0 : vector<1x15x512xf32> to vector<15x512xf32>
    %2 = arith.negf %1 : vector<15x512xf32>
    %3 = math.exp %2 : vector<15x512xf32>
    %cst = arith.constant 1.000000e+00 : f32
    %4 = vector.broadcast %cst : f32 to vector<15x512xf32>
    %5 = arith.addf %4, %3 : vector<15x512xf32>
    %6 = arith.divf %4, %5 : vector<15x512xf32>
    %7 = arith.mulf %1, %6 : vector<15x512xf32>
    %c0_2 = arith.constant 0 : index
    %c0_3 = arith.constant 0 : index
    %8 = vector.load %arg3[%c0_2, %c0_3] : memref<16x15xf32, #tpu.memory_space<vmem>>, vector<16x15xf32>
    %cst_4 = arith.constant dense<0.000000e+00> : vector<16x512xf32>
    %9 = tpu.matmul %8, %7, %cst_4 {dimension_numbers = #tpu.dot_dimension_numbers<[1], [0], [0], [1], [0, 0, 1, 1], [], []>} : vector<16x15xf32>, vector<15x512xf32>, vector<16x512xf32> -> vector<16x512xf32>
    %c0_5 = arith.constant 0 : index
    %c0_6 = arith.constant 0 : index
    %10 = vector.load %arg4[%c0_5, %c0_6] : memref<16x1xf32, #tpu.memory_space<vmem>>, vector<16x1xf32>
    %11 = vector.broadcast %10 : vector<16x1xf32> to vector<16x512xf32>
    %12 = arith.addf %9, %11 : vector<16x512xf32>
    %c0_7 = arith.constant 0 : index
    %c0_8 = arith.constant 0 : index
    %c0_9 = arith.constant 0 : index
    %13 = vector.load %arg5[%c0_7, %c0_8, %c0_9] : memref<1x16x512xf32, #tpu.memory_space<vmem>>, vector<1x16x512xf32>
    %14 = vector.shape_cast %13 : vector<1x16x512xf32> to vector<16x512xf32>
    %15 = vector.shape_cast %12 : vector<16x512xf32> to vector<1x16x512xf32>
    tpu.vector_store %arg5[%c0_7, %c0_8, %c0_9], %15 {strides = array<i32>} : memref<1x16x512xf32, #tpu.memory_space<vmem>>, vector<1x16x512xf32>,
    return
  }
  func.func @transform_0(%arg0: i32, %arg1: i32) -> (i32, i32, i32) {
    %c0_i32 = arith.constant 0 : i32
    %c0_i32_0 = arith.constant 0 : i32
    return %arg0, %c0_i32, %arg1 : i32, i32, i32
  }
  func.func @transform_1(%arg0: i32, %arg1: i32) -> (i32, i32) {
    %c0_i32 = arith.constant 0 : i32
    %c0_i32_0 = arith.constant 0 : i32
    %c0_i32_1 = arith.constant 0 : i32
    return %c0_i32, %c0_i32_0 : i32, i32
  }
  func.func @transform_2(%arg0: i32, %arg1: i32) -> (i32, i32) {
    %c0_i32 = arith.constant 0 : i32
    %c0_i32_0 = arith.constant 0 : i32
    %c0_i32_1 = arith.constant 0 : i32
    return %c0_i32, %c0_i32_0 : i32, i32
  }
  func.func @transform_3(%arg0: i32, %arg1: i32) -> (i32, i32, i32) {
    %c0_i32 = arith.constant 0 : i32
    %c0_i32_0 = arith.constant 0 : i32
    return %arg0, %c0_i32, %arg1 : i32, i32, i32
  }
}

</mosaic_0001>

<llo_original>
// kernel: time_upsample2x.1
$region0: #{time_upsample2x.1}
  #allocation0 [shape = 'u32[]', space=smem, size = 0x4, offset = 0x4, fixed_abs, tag = 'smem constant byte address 0x4 - core index']
  #allocation1 [shape = 'u32[144,128]{1,0:T(1,128)}', space=vmem, size = 0x12000, scoped, tag = 'internal scratch']
  %s0 = inlined_call_operand.vmem [shape: f32[2,15,512], index: 0, kind: input, shape index: {}]
  %s1 = inlined_call_operand.vmem [shape: f32[16,15], index: 1, kind: input, shape index: {}]
  %s2 = inlined_call_operand.vmem [shape: f32[16,1], index: 2, kind: input, shape index: {}]
  %s3 = inlined_call_operand.vmem [shape: f32[2,16,512], index: 3, kind: output, shape index: {}]
  %s4 = sld [smem:[#allocation0]]
  $region45: #{time_upsample2x.1} parent=0
    _
  %s6 = ssub.s32 1, %s4
  %s7 = scalar_select 0, %s6, %s4
  loop: start=0, step=1, limit=4
  $region2: #{time_upsample2x.1} parent=0 // loop_pre_header
    _
  $region3: #{time_upsample2x.1} parent=0 // loop_header
    %s9 = sphi 0, %s13
    %p10 = scmp.ge.s32.totalorder %s9, 4
    %s16 = sphi 0, %s28
    %s17 = sphi 0, %s24
    %s18 = sphi 0, %s16
    %s19 = sphi 0, %s17
    %s20 = sphi 0, %s18
    %s21 = sphi 0, %s19
    %s33 = sphi 0, %s35
    %s36 = sphi 0, %s33
    %s37 = sphi 0, %s36
    %s53 = sphi 0, %s37
    %s57 = sphi 0, %s57
    %s59 = sphi 0, %s57
    %s60 = sphi 0, %s59
    %s74 = sphi 0, %s60
    %s78 = sphi 0, %s78
    %s80 = sphi 0, %s78
    %s81 = sphi 0, %s80
    %s95 = sphi 0, %s81
    %s103 = sphi 0, %s105
    %s106 = sphi 0, %s103
    %s107 = sphi 0, %s106
    %s123 = sphi 0, %s107
  $region4: #{time_upsample2x.1} parent=0 // loop_header_branch
    %12 = sbr.rel (%p10) target = $region8
  $region5: #{time_upsample2x.1} parent=0 // loop_body
    %s14 = ssub.s32 %s9, 1
    %s15 = ssub.s32 %s9, 2
    %s22 = sadd.s32 1, %s17
    %p23 = scmp.ge.s32.totalorder %s22, 1
    %s24 = scalar_select %p23, 0, %s22
    %s25 = sadd.s32 1, %s16
    %s26 = scalar_select %p23, %s25, %s16
    %p27 = scmp.ge.s32.totalorder %s26, 2
    %s28 = scalar_select %p27, 0, %s26
    %s29 = ssub.s32 %s16, %s28
    %s30 = ssub.s32 %s17, %s24
    %s31 = sor.u32 %s29, %s30
    %p32 = scmp.eq.s32.totalorder %s31, 0
    %s34 = sadd.s32 %s33, 1
    %s35 = scalar_select %p32, %s33, %s34
    %p38 = pneg %p32
    %p39 = scmp.eq.s32.totalorder %s9, 1
    %p40 = por %p38, %p39
    %p41 = scmp.ne.s32.totalorder %s33, %s36
    %p42 = scmp.eq.s32.totalorder %s9, 0
    %p43 = por %p41, %p42
    %p44 = scmp.ne.s32.totalorder %s33, %s36
    %p45 = scmp.eq.s32.totalorder %s14, 1
    %p46 = por %p44, %p45
    %p47 = scmp.ne.s32.totalorder %s36, %s37
    %p48 = scmp.eq.s32.totalorder %s14, 0
    %p49 = por %p47, %p48
    %p50 = scmp.ne.s32.totalorder %s36, %s37
    %p51 = scmp.eq.s32.totalorder %s15, 1
    %p52 = por %p50, %p51
    %p54 = scmp.ne.s32.totalorder %s37, %s53
    %p55 = scmp.eq.s32.totalorder %s15, 0
    %p56 = por %p54, %p55
    %s58 = sadd.s32 %s57, 1
    %p61 = scmp.eq.s32.totalorder %s9, 1
    %p62 = scmp.ne.s32.totalorder %s57, %s59
    %p63 = scmp.eq.s32.totalorder %s9, 0
    %p64 = por %p62, %p63
    %p65 = scmp.ne.s32.totalorder %s57, %s59
    %p66 = scmp.eq.s32.totalorder %s14, 1
    %p67 = por %p65, %p66
    %p68 = scmp.ne.s32.totalorder %s59, %s60
    %p69 = scmp.eq.s32.totalorder %s14, 0
    %p70 = por %p68, %p69
    %p71 = scmp.ne.s32.totalorder %s59, %s60
    %p72 = scmp.eq.s32.totalorder %s15, 1
    %p73 = por %p71, %p72
    %p75 = scmp.ne.s32.totalorder %s60, %s74
    %p76 = scmp.eq.s32.totalorder %s15, 0
    %p77 = por %p75, %p76
    %s79 = sadd.s32 %s78, 1
    %p82 = scmp.eq.s32.totalorder %s9, 1
    %p83 = scmp.ne.s32.totalorder %s78, %s80
    %p84 = scmp.eq.s32.totalorder %s9, 0
    %p85 = por %p83, %p84
    %p86 = scmp.ne.s32.totalorder %s78, %s80
    %p87 = scmp.eq.s32.totalorder %s14, 1
    %p88 = por %p86, %p87
    %p89 = scmp.ne.s32.totalorder %s80, %s81
    %p90 = scmp.eq.s32.totalorder %s14, 0
    %p91 = por %p89, %p90
    %p92 = scmp.ne.s32.totalorder %s80, %s81
    %p93 = scmp.eq.s32.totalorder %s15, 1
    %p94 = por %p92, %p93
    %p96 = scmp.ne.s32.totalorder %s81, %s95
    %p97 = scmp.eq.s32.totalorder %s15, 0
    %p98 = por %p96, %p97
    %s99 = ssub.s32 %s16, %s28
    %s100 = ssub.s32 %s17, %s24
    %s101 = sor.u32 %s99, %s100
    %p102 = scmp.eq.s32.totalorder %s101, 0
    %s104 = sadd.s32 %s103, 1
    %s105 = scalar_select %p102, %s103, %s104
    %p108 = pneg %p102
    %p109 = scmp.eq.s32.totalorder %s9, 1
    %p110 = por %p108, %p109
    %p111 = scmp.ne.s32.totalorder %s103, %s106
    %p112 = scmp.eq.s32.totalorder %s9, 0
    %p113 = por %p111, %p112
    %p114 = scmp.ne.s32.totalorder %s103, %s106
    %p115 = scmp.eq.s32.totalorder %s14, 1
    %p116 = por %p114, %p115
    %p117 = scmp.ne.s32.totalorder %s106, %s107
    %p118 = scmp.eq.s32.totalorder %s14, 0
    %p119 = por %p117, %p118
    %p120 = scmp.ne.s32.totalorder %s106, %s107
    %p121 = scmp.eq.s32.totalorder %s15, 1
    %p122 = por %p120, %p121
    %p124 = scmp.ne.s32.totalorder %s107, %s123
    %p125 = scmp.eq.s32.totalorder %s15, 0
    %p126 = por %p124, %p125
    %p127 = scmp.le.s32.totalorder 1, %s9
    %p128 = scmp.lt.s32.totalorder %s9, 3
    %p129 = pnand %p127, %p128
    %p130 = pneg %p129
    // Predicated region
    $region9: #{time_upsample2x.1} parent=5 // pred_check
      _
    $region10: #{time_upsample2x.1} parent=5 // pred_check_branch
      %132 = sbr.rel (%p129) target = $region12
    $region11: #{time_upsample2x.1} parent=5 // pred_region
      %s133 = ssub.s32 %s9, 1
      // Predicated region
      $region13: #{time_upsample2x.1} parent=11 // pred_check
        %p134 = pneg %p70
      $region14: #{time_upsample2x.1} parent=11 // pred_check_branch
        %136 = sbr.rel (%p134) target = $region16
      $region15: #{time_upsample2x.1} parent=11 // pred_region
        _
      $region16: #{time_upsample2x.1} parent=11 // pred_fallthru
        _
      // Predicated region
      $region17: #{time_upsample2x.1} parent=11 // pred_check
        %p137 = pneg %p91
      $region18: #{time_upsample2x.1} parent=11 // pred_check_branch
        %139 = sbr.rel (%p137) target = $region20
      $region19: #{time_upsample2x.1} parent=11 // pred_region
        _
      $region20: #{time_upsample2x.1} parent=11 // pred_fallthru
        _
    $region12: #{time_upsample2x.1} parent=5 // pred_fallthru
      _
    %p140 = scmp.lt.s32.totalorder %s9, 2
    // Predicated region
    $region21: #{time_upsample2x.1} parent=5 // pred_check
      %p141 = pneg %p140
    $region22: #{time_upsample2x.1} parent=5 // pred_check_branch
      %143 = sbr.rel (%p141) target = $region24
    $region23: #{time_upsample2x.1} parent=5 // pred_region
      // Predicated region
      $region25: #{time_upsample2x.1} parent=23 // pred_check
        %p144 = pneg %p43
      $region26: #{time_upsample2x.1} parent=23 // pred_check_branch
        %146 = sbr.rel (%p144) target = $region28
      $region27: #{time_upsample2x.1} parent=23 // pred_region
        %s147 = smul.u32 4, %s17
        %p148 = scmp.lt.s32.totalorder %s16, 1
        %s149 = scalar_select %p148, %s16, 1
        %p150 = scmp.lt.s32.totalorder %s147, 3
        %s151 = scalar_select %p150, %s147, 3
        %s152 = smul.addr %s149, 8
        %s153 = sadd.s32 %s151, %s152
        %s154 = smul.addr %s153, 8
        %s155 = scalar_lea.vmem %s0, %s154
        %s156 = smul.u32 4, %s17
      $region28: #{time_upsample2x.1} parent=23 // pred_fallthru
        _
    $region24: #{time_upsample2x.1} parent=5 // pred_fallthru
      _
    %p157 = scmp.le.s32.totalorder 1, %s9
    %p158 = scmp.lt.s32.totalorder %s9, 3
    %p159 = pnand %p157, %p158
    %p160 = pneg %p159
    // Predicated region
    $region29: #{time_upsample2x.1} parent=5 // pred_check
      _
    $region30: #{time_upsample2x.1} parent=5 // pred_check_branch
      %162 = sbr.rel (%p159) target = $region32
    $region31: #{time_upsample2x.1} parent=5 // pred_region
      %s163 = ssub.s32 %s9, 1
      %s164 = smul.u32 4, %s19
      %p165 = scmp.lt.s32.totalorder %s18, 1
      %s166 = scalar_select %p165, %s18, 1
      %p167 = scmp.lt.s32.totalorder %s164, 3
      %s168 = scalar_select %p167, %s164, 3
      %s169 = smul.addr %s166, 8
      %s170 = sadd.s32 %s168, %s169
      %s171 = smul.addr %s170, 8
      %s172 = scalar_lea.vmem %s0, %s171
      %p173 = pneg %p49
      %p174 = pneg %p46
      %p175 = pneg %p70
      %p176 = pneg %p67
      %p177 = pneg %p91
      %p178 = pneg %p88
      %p179 = pneg %p119
      %p180 = pneg %p116
      %s181 = smul.u32 4, %s19
      %p182 = scmp.lt.s32.totalorder %s18, 1
      %s183 = scalar_select %p182, %s18, 1
      %p184 = scmp.lt.s32.totalorder %s181, 3
      %s185 = scalar_select %p184, %s181, 3
      %s186 = smul.addr %s183, 8
      %s187 = sadd.s32 %s185, %s186
      %s188 = smul.addr %s187, 8
      %s189 = scalar_lea.vmem %s3, %s188
      %s190 = smul.u32 4, %s19
      %p191 = scmp.lt.s32.totalorder %s18, 1
      %s192 = scalar_select %p191, %s18, 1
      %p193 = scmp.lt.s32.totalorder %s190, 3
      %s194 = scalar_select %p193, %s190, 3
      %s195 = smul.addr %s192, 8
      %s196 = sadd.s32 %s194, %s195
      %s197 = smul.addr %s196, 8
      %s198 = scalar_lea.vmem %s0, %s197
      %s199 = smul.u32 4, %s19
      %s200 = smul.u32 4, %s19
      %p201 = scmp.lt.s32.totalorder %s18, 1
      %s202 = scalar_select %p201, %s18, 1
      %p203 = scmp.lt.s32.totalorder %s200, 3
      %s204 = scalar_select %p203, %s200, 3
      %s205 = smul.addr %s202, 8
      %s206 = sadd.s32 %s204, %s205
      %s207 = smul.addr %s206, 8
      %s208 = scalar_lea.vmem %s3, %s207
      %s209 = smul.u32 4, %s19
      %v210 = vld [vmem:[%s198] sm:$0xff]
      %v211 = vld [vmem:[%s198 + $0x8] sm:$0xff]
      %v212 = vld [vmem:[%s198 + $0x10] sm:$0xff]
      %v213 = vld [vmem:[%s198 + $0x18] sm:$0xff]
      %v214 = vld [vmem:[%s198 + $0x20] sm:$0x7f]
      %v215 = vld [vmem:[%s198 + $0x28] sm:$0x7f]
      %v216 = vld [vmem:[%s198 + $0x30] sm:$0x7f]
      %v217 = vld [vmem:[%s198 + $0x38] sm:$0x7f]
      %v218 = vxor.u32 %v210, 2147483648
      %v219 = vxor.u32 %v211, 2147483648
      %v220 = vxor.u32 %v212, 2147483648
      %v221 = vxor.u32 %v213, 2147483648
      %v222 = vxor.u32 %v214, 2147483648
      %v223 = vxor.u32 %v215, 2147483648
      %v224 = vxor.u32 %v216, 2147483648
      %v225 = vxor.u32 %v217, 2147483648
      %v226 = vmul.f32 %v218, 1.442695
      %v227 = vpow.pop %v226
      %v228 = vmul.f32 %v219, 1.442695
      %v229 = vpow.pop %v228
      %v230 = vmul.f32 %v220, 1.442695
      %v231 = vpow.pop %v230
      %v232 = vmul.f32 %v221, 1.442695
      %v233 = vpow.pop %v232
      %v234 = vmul.f32 %v222, 1.442695
      %v235 = vpow.pop %v234
      %v236 = vmul.f32 %v223, 1.442695
      %v237 = vpow.pop %v236
      %v238 = vmul.f32 %v224, 1.442695
      %v239 = vpow.pop %v238
      %v240 = vmul.f32 %v225, 1.442695
      %v241 = vpow.pop %v240
      %v242 = vadd.f32 %v227, 1.0
      %v243 = vadd.f32 %v229, 1.0
      %v244 = vadd.f32 %v231, 1.0
      %v245 = vadd.f32 %v233, 1.0
      %v246 = vadd.f32 %v235, 1.0
      %v247 = vadd.f32 %v237, 1.0
      %v248 = vadd.f32 %v239, 1.0
      %v249 = vadd.f32 %v241, 1.0
      %v250 = vrcp.pop %v242
      %v251 = vmul.f32 1.0, %v250
      %v252 = vrcp.pop %v243
      %v253 = vmul.f32 1.0, %v252
      %v254 = vrcp.pop %v244
      %v255 = vmul.f32 1.0, %v254
      %v256 = vrcp.pop %v245
      %v257 = vmul.f32 1.0, %v256
      %v258 = vrcp.pop %v246
      %v259 = vmul.f32 1.0, %v258
      %v260 = vrcp.pop %v247
      %v261 = vmul.f32 1.0, %v260
      %v262 = vrcp.pop %v248
      %v263 = vmul.f32 1.0, %v262
      %v264 = vrcp.pop %v249
      %v265 = vmul.f32 1.0, %v264
      %v266 = vmul.f32 %v210, %v251
      %v267 = vmul.f32 %v211, %v253
      %v268 = vmul.f32 %v212, %v255
      %v269 = vmul.f32 %v213, %v257
      %v270 = vmul.f32 %v214, %v259
      %v271 = vmul.f32 %v215, %v261
      %v272 = vmul.f32 %v216, %v263
      %v273 = vmul.f32 %v217, %v265
      %v274 = vld [vmem:[%s1] sm:$0xff]
      %v275 = vld [vmem:[%s1 + $0x8] sm:$0xff]
      %v276 = vld [vmem:[%s2] sm:$0xff]
      %v277 = vld [vmem:[%s2 + $0x8] sm:$0xff]
      %279 = vset.pattern.permute.xlu0 0
      %280 = vperm.xlu0 %279, %v276
      %v281 = vpop.permute.xlu0 %280
      %284 = vset.pattern.permute.xlu0 0
      %285 = vperm.xlu0 %284, %v277
      %v286 = vpop.permute.xlu0 %285
      %vm288 = vcmask 121856
      %v290 = vsel %vm288, %v274, 0
      %v293 = vsel %vm288, %v275, 0
      %vm295 = vcmask 1046528
      %v297 = vsel %vm295, %v270, 0
      %v300 = vsel %vm295, %v271, 0
      %v303 = vsel %vm295, %v272, 0
      %v306 = vsel %vm295, %v273, 0
      %308 = vmatprep.subr.mxu0 %v267
      %309 = vmatpush1.msra.mxu0 %v266
      %310 = vmatprep.subr.mxu0 %v300
      %311 = vmatpush1.msra.mxu0 %v297
      %312 = vmatprep.subr.mxu0 0.0
      %313 = vmatpush1.msra.mxu0 0.0
      %314 = vmatprep.subr.mxu0 0.0
      %315 = vmatpush1.msra.mxu0 0.0
      %316 = vmatprep.subr.mxu0 0.0
      %317 = vmatpush1.msra.mxu0 0.0
      %318 = vmatprep.subr.mxu0 0.0
      %319 = vmatpush1.msra.mxu0 0.0
      %320 = vmatprep.subr.mxu0 0.0
      %321 = vmatpush1.msra.mxu0 0.0
      %322 = vmatprep.subr.mxu0 0.0
      %323 = vmatpush1.msra.mxu0 0.0
      %324 = vmatprep.subr.mxu0 0.0
      %325 = vmatpush1.msra.mxu0 0.0
      %326 = vmatprep.subr.mxu0 0.0
      %327 = vmatpush1.msra.mxu0 0.0
      %328 = vmatprep.subr.mxu0 0.0
      %329 = vmatpush1.msra.mxu0 0.0
      %330 = vmatprep.subr.mxu0 0.0
      %331 = vmatpush1.msra.mxu0 0.0
      %332 = vmatprep.subr.mxu0 0.0
      %333 = vmatpush1.msra.mxu0 0.0
      %334 = vmatprep.subr.mxu0 0.0
      %335 = vmatpush1.msra.mxu0 0.0
      %336 = vmatprep.subr.mxu0 0.0
      %337 = vmatpush1.msra.mxu0 0.0
      %338 = vmatprep.subr.mxu0 0.0
      %339 = vmatpush1.msra.mxu0 0.0
      %340 = vmatprep.subr.mxu0 0.0
      %341 = vmatpush1.msra.mxu0 0.0
      %342 = vmatprep.subr.mxu0 0.0
      %343 = vmatpush1.msra.mxu0 0.0
      %344 = vmatprep.subr.mxu0 0.0
      %345 = vmatpush1.msra.mxu0 0.0
      %346 = vmatprep.subr.mxu0 0.0
      %347 = vmatpush1.msra.mxu0 0.0
      %348 = vmatprep.subr.mxu0 0.0
      %349 = vmatpush1.msra.mxu0 0.0
      %350 = vmatprep.subr.mxu0 0.0
      %351 = vmatpush1.msra.mxu0 0.0
      %352 = vmatprep.subr.mxu0 0.0
      %353 = vmatpush1.msra.mxu0 0.0
      %354 = vmatprep.subr.mxu0 0.0
      %355 = vmatpush1.msra.mxu0 0.0
      %356 = vmatprep.subr.mxu0 0.0
      %357 = vmatpush1.msra.mxu0 0.0
      %358 = vmatprep.subr.mxu0 0.0
      %359 = vmatpush1.msra.mxu0 0.0
      %360 = vmatprep.subr.mxu0 0.0
      %361 = vmatpush1.msra.mxu0 0.0
      %362 = vmatprep.subr.mxu0 0.0
      %363 = vmatpush1.msra.mxu0 0.0
      %364 = vmatprep.subr.mxu0 0.0
      %365 = vmatpush1.msra.mxu0 0.0
      %366 = vmatprep.subr.mxu0 0.0
      %367 = vmatpush1.msra.mxu0 0.0
      %368 = vmatprep.subr.mxu0 0.0
      %369 = vmatpush1.msra.mxu0 0.0
      %370 = vmatprep.subr.mxu0 0.0
      %371 = vmatpush1.msra.mxu0 0.0
      %372 = vmatprep.mubr.f32.mxu0 0.0
      %373 = vmatmul.mubr.f32.gmra.mrb[0].mxu0 %v290
      %v374 = vpop.f32.mrb[0].mxu0
      %v375 = vadd.f32 %v281, %v374
      %v376 = vpop.f32.mrb[0].mxu0
      %v377 = vadd.f32 %v281, %v376
      %378 = vmatprep.mubr.f32.mxu0 0.0
      %379 = vmatmul.mubr.f32.gmra.mrb[0].mxu0 %v293
      %v380 = vpop.f32.mrb[0].mxu0
      %v381 = vadd.f32 %v286, %v380
      %v382 = vpop.f32.mrb[0].mxu0
      %v383 = vadd.f32 %v286, %v382
      %384 = vdwg.mxu0
      %385 = vmatprep.subr.mxu0 %v269
      %386 = vmatpush1.msra.mxu0 %v268
      %387 = vmatprep.subr.mxu0 %v306
      %388 = vmatpush1.msra.mxu0 %v303
      %389 = vmatprep.subr.mxu0 0.0
      %390 = vmatpush1.msra.mxu0 0.0
      %391 = vmatprep.subr.mxu0 0.0
      %392 = vmatpush1.msra.mxu0 0.0
      %393 = vmatprep.subr.mxu0 0.0
      %394 = vmatpush1.msra.mxu0 0.0
      %395 = vmatprep.subr.mxu0 0.0
      %396 = vmatpush1.msra.mxu0 0.0
      %397 = vmatprep.subr.mxu0 0.0
      %398 = vmatpush1.msra.mxu0 0.0
      %399 = vmatprep.subr.mxu0 0.0
      %400 = vmatpush1.msra.mxu0 0.0
      %401 = vmatprep.subr.mxu0 0.0
      %402 = vmatpush1.msra.mxu0 0.0
      %403 = vmatprep.subr.mxu0 0.0
      %404 = vmatpush1.msra.mxu0 0.0
      %405 = vmatprep.subr.mxu0 0.0
      %406 = vmatpush1.msra.mxu0 0.0
      %407 = vmatprep.subr.mxu0 0.0
      %408 = vmatpush1.msra.mxu0 0.0
      %409 = vmatprep.subr.mxu0 0.0
      %410 = vmatpush1.msra.mxu0 0.0
      %411 = vmatprep.subr.mxu0 0.0
      %412 = vmatpush1.msra.mxu0 0.0
      %413 = vmatprep.subr.mxu0 0.0
      %414 = vmatpush1.msra.mxu0 0.0
      %415 = vmatprep.subr.mxu0 0.0
      %416 = vmatpush1.msra.mxu0 0.0
      %417 = vmatprep.subr.mxu0 0.0
      %418 = vmatpush1.msra.mxu0 0.0
      %419 = vmatprep.subr.mxu0 0.0
      %420 = vmatpush1.msra.mxu0 0.0
      %421 = vmatprep.subr.mxu0 0.0
      %422 = vmatpush1.msra.mxu0 0.0
      %423 = vmatprep.subr.mxu0 0.0
      %424 = vmatpush1.msra.mxu0 0.0
      %425 = vmatprep.subr.mxu0 0.0
      %426 = vmatpush1.msra.mxu0 0.0
      %427 = vmatprep.subr.mxu0 0.0
      %428 = vmatpush1.msra.mxu0 0.0
      %429 = vmatprep.subr.mxu0 0.0
      %430 = vmatpush1.msra.mxu0 0.0
      %431 = vmatprep.subr.mxu0 0.0
      %432 = vmatpush1.msra.mxu0 0.0
      %433 = vmatprep.subr.mxu0 0.0
      %434 = vmatpush1.msra.mxu0 0.0
      %435 = vmatprep.subr.mxu0 0.0
      %436 = vmatpush1.msra.mxu0 0.0
      %437 = vmatprep.subr.mxu0 0.0
      %438 = vmatpush1.msra.mxu0 0.0
      %439 = vmatprep.subr.mxu0 0.0
      %440 = vmatpush1.msra.mxu0 0.0
      %441 = vmatprep.subr.mxu0 0.0
      %442 = vmatpush1.msra.mxu0 0.0
      %443 = vmatprep.subr.mxu0 0.0
      %444 = vmatpush1.msra.mxu0 0.0
      %445 = vmatprep.subr.mxu0 0.0
      %446 = vmatpush1.msra.mxu0 0.0
      %447 = vmatprep.subr.mxu0 0.0
      %448 = vmatpush1.msra.mxu0 0.0
      %449 = vmatprep.mubr.f32.mxu0 0.0
      %450 = vmatmul.mubr.f32.gmra.mrb[0].mxu0 %v290
      %v451 = vpop.f32.mrb[0].mxu0
      %v452 = vadd.f32 %v281, %v451
      %v453 = vpop.f32.mrb[0].mxu0
      %v454 = vadd.f32 %v281, %v453
      %455 = vmatprep.mubr.f32.mxu0 0.0
      %456 = vmatmul.mubr.f32.gmra.mrb[0].mxu0 %v293
      %v457 = vpop.f32.mrb[0].mxu0
      %v458 = vadd.f32 %v286, %v457
      %v459 = vpop.f32.mrb[0].mxu0
      %v460 = vadd.f32 %v286, %v459
      %461 = vdwg.mxu0
      %462 = vst [vmem:[%s208] sm:$0xff] %v375
      %463 = vst [vmem:[%s208 + $0x8] sm:$0xff] %v377
      %464 = vst [vmem:[%s208 + $0x10] sm:$0xff] %v452
      %465 = vst [vmem:[%s208 + $0x18] sm:$0xff] %v454
      %466 = vst [vmem:[%s208 + $0x20] sm:$0xff] %v381
      %467 = vst [vmem:[%s208 + $0x28] sm:$0xff] %v383
      %468 = vst [vmem:[%s208 + $0x30] sm:$0xff] %v458
      %469 = vst [vmem:[%s208 + $0x38] sm:$0xff] %v460
      %s470 = smul.u32 4, %s19
      %p471 = scmp.lt.s32.totalorder %s18, 1
      %s472 = scalar_select %p471, %s18, 1
      %p473 = scmp.lt.s32.totalorder %s470, 3
      %s474 = scalar_select %p473, %s470, 3
      %s475 = smul.addr %s472, 8
      %s476 = sadd.s32 %s474, %s475
      %s477 = smul.addr %s476, 8
      %s478 = scalar_lea.vmem %s3, %s477
      // Predicated region
      $region33: #{time_upsample2x.1} parent=31 // pred_check
        %p479 = pneg %p116
      $region34: #{time_upsample2x.1} parent=31 // pred_check_branch
        %481 = sbr.rel (%p479) target = $region36
      $region35: #{time_upsample2x.1} parent=31 // pred_region
        %s482 = smul.u32 4, %s19
      $region36: #{time_upsample2x.1} parent=31 // pred_fallthru
        _
    $region32: #{time_upsample2x.1} parent=5 // pred_fallthru
      _
    %p483 = scmp.le.s32.totalorder 2, %s9
    // Predicated region
    $region37: #{time_upsample2x.1} parent=5 // pred_check
      %p484 = pneg %p483
    $region38: #{time_upsample2x.1} parent=5 // pred_check_branch
      %486 = sbr.rel (%p484) target = $region40
    $region39: #{time_upsample2x.1} parent=5 // pred_region
      %s487 = ssub.s32 %s9, 2
      // Predicated region
      $region41: #{time_upsample2x.1} parent=39 // pred_check
        %p488 = pneg %p122
      $region42: #{time_upsample2x.1} parent=39 // pred_check_branch
        %490 = sbr.rel (%p488) target = $region44
      $region43: #{time_upsample2x.1} parent=39 // pred_region
        %s491 = smul.u32 4, %s21
        %p492 = scmp.lt.s32.totalorder %s20, 1
        %s493 = scalar_select %p492, %s20, 1
        %p494 = scmp.lt.s32.totalorder %s491, 3
        %s495 = scalar_select %p494, %s491, 3
        %s496 = smul.addr %s493, 8
        %s497 = sadd.s32 %s495, %s496
        %s498 = smul.addr %s497, 8
        %s499 = scalar_lea.vmem %s3, %s498
      $region44: #{time_upsample2x.1} parent=39 // pred_fallthru
        _
    $region40: #{time_upsample2x.1} parent=5 // pred_fallthru
      _
  $region6: #{time_upsample2x.1} parent=0 // loop_footer
    %s13 = sadd.s32 1, %s9
  $region7: #{time_upsample2x.1} parent=0 // loop_footer_branch
    %8 = sbr.rel target = $region3
  $region8: #{time_upsample2x.1} parent=0 // loop_exit
    _

</llo_original>
